<compile_context>
chip_gen: v5e
topology: v5e:2x2
jax: 0.10.0
libtpu: 0.0.40
codegen_flags: <defaults>
</compile_context>

<pallas_src>
import jax
import jax.numpy as jnp
from jax import lax
from jax.experimental import pallas as pl
from jax.experimental.pallas import tpu as pltpu

BN_EPS = 1e-5


def _encoder_kernel(pooled_ref, proj_ref, w_ref, bn_ref, out_ref):
    """Fused stand-in projection + Linear(2048, E) + BatchNorm1d (batch stats)."""
    C = pooled_ref.shape[1]

    # Stand-in backbone projection, fused so the (B, 2048) features never
    # round-trip through HBM.  The contraction dim is C (= 3), far below a lane
    # tile, so a broadcast multiply-accumulate on the VPU is used instead of a
    # padded MXU matmul.  Accumulate in f32 (portable to v5e, which has no bf16
    # VALU); cast once to bf16 right before the MXU.
    feat = pooled_ref[:, 0:1] * proj_ref[0:1, :]          # (B, 1) * (1, D) -> (B, D)
    for c in range(1, C):                                  # static, unrolled (C is tiny)
        feat = feat + pooled_ref[:, c:c + 1] * proj_ref[c:c + 1, :]

    # fc: Linear(2048, E).  Weight stays bf16 (halved HBM stream, no on-chip f32
    # copy); bf16 x bf16 -> f32 is the native single-pass MXU mode everywhere.
    # The fc bias is intentionally omitted: training-mode BatchNorm subtracts the
    # per-feature batch mean, which cancels any per-feature constant exactly.
    y = jnp.dot(feat.astype(jnp.bfloat16), w_ref[...],
                preferred_element_type=jnp.float32)        # (B, E) f32 accumulate

    # BatchNorm1d, training mode: biased batch statistics over the batch axis.
    mean = jnp.mean(y, axis=0, keepdims=True)              # (1, E)  XLU sublane reduce
    var = jnp.mean((y - mean) ** 2, axis=0, keepdims=True) # (1, E)
    y_hat = (y - mean) * lax.rsqrt(var + BN_EPS)           # EUP rsqrt
    gamma = bn_ref[0:1, :]
    beta = bn_ref[1:2, :]
    out_ref[...] = (y_hat * gamma + beta).astype(out_ref.dtype)


@jax.jit
def encoder_forward(imgs, params):
    """imgs: (B, C, H, W) f32 NCHW.  Returns (B, E) f32."""
    # TODO(synk): pretrained resnet152 backbone (frozen torchvision checkpoint) has
    # no in-script Pallas equivalent; stand-in = global average pool + fixed projection.
    pooled = jnp.mean(imgs, axis=(2, 3))                   # (B, C) global avg pool
    proj = params["backbone_proj"]                         # (C, D) f32
    w = params["fc_w"]                                     # (D, E) bf16
    bn = params["bn_gb"]                                   # (2, E) f32, pre-packed at init

    B, C = pooled.shape
    D, E = w.shape

    return pl.pallas_call(
        _encoder_kernel,
        out_shape=jax.ShapeDtypeStruct((B, E), jnp.float32),
        grid=(1,),                                   # single step: everything in VMEM
        in_specs=[
            pl.BlockSpec((B, C), lambda i: (0, 0)),  # pooled image stats (full block)
            pl.BlockSpec((C, D), lambda i: (0, 0)),  # stand-in projection
            pl.BlockSpec((D, E), lambda i: (0, 0)),  # fc weight, bf16 (dominant DMA)
            pl.BlockSpec((2, E), lambda i: (0, 0)),  # packed [gamma; beta]
        ],
        out_specs=pl.BlockSpec((B, E), lambda i: (0, 0)),  # lane-dense E = 128
        compiler_params=pltpu.CompilerParams(
            dimension_semantics=("arbitrary",),
        ),
    )(pooled, proj, w, bn)


def init_params(key, in_channels, feat_dim, embedding_size):
    k1, k2, k3 = jax.random.split(key, 3)
    # Stand-in backbone projection (deterministic).
    proj = jax.random.normal(k1, (in_channels, feat_dim), jnp.float32) * 0.1
    # nn.Linear(2048, embedding_size): stored transposed as (D, E).  The kernel is
    # HBM-bandwidth bound on this weight stream, so it is stored/streamed in bf16
    # and fed to the MXU in bf16 directly.
    bound = 1.0 / (feat_dim ** 0.5)
    fc_w = jax.random.uniform(
        k2, (feat_dim, embedding_size), jnp.float32, -bound, bound
    ).astype(jnp.bfloat16)
    fc_b = jax.random.uniform(k3, (embedding_size,), jnp.float32, -bound, bound)
    # nn.BatchNorm1d defaults: gamma=1, beta=0.  Pre-packed as one (2, E) block so
    # the forward pass does no per-call stack/concatenate and a single small DMA.
    bn_gb = jnp.stack([
        jnp.ones((embedding_size,), jnp.float32),   # gamma
        jnp.zeros((embedding_size,), jnp.float32),  # beta
    ])
    return {
        "backbone_proj": proj,
        "fc_w": fc_w,
        "fc_b": fc_b,          # kept for module fidelity; cancelled by batch-stats BN
        "bn_gb": bn_gb,
    }


def _reference(imgs, params):
    pooled = jnp.mean(imgs, axis=(2, 3))
    # HIGHEST precision so the reference projection matches the kernel's exact f32 VPU MAC.
    feats = jnp.dot(pooled, params["backbone_proj"], precision=lax.Precision.HIGHEST)
    # Same bf16 MXU path as the kernel (bf16-quantized weight, bf16 lhs, f32 accumulate).
    y = jnp.dot(feats.astype(jnp.bfloat16), params["fc_w"],
                preferred_element_type=jnp.float32) + params["fc_b"]
    mean = jnp.mean(y, axis=0, keepdims=True)
    var = jnp.mean((y - mean) ** 2, axis=0, keepdims=True)
    gamma = params["bn_gb"][0]
    beta = params["bn_gb"][1]
    return (y - mean) / jnp.sqrt(var + BN_EPS) * gamma + beta


if __name__ == "__main__":
    B, C, H, W = 8, 3, 16, 16        # small NCHW images
    FEAT_DIM = 2048                  # resnet152 feature dim (fixed by the module)
    EMBED = 128                      # embedding_size (lane-dense)

    key = jax.random.PRNGKey(0)
    k_img, k_par = jax.random.split(key)
    imgs = jax.random.normal(k_img, (B, C, H, W), jnp.float32)
    params = init_params(k_par, C, FEAT_DIM, EMBED)

    out = encoder_forward(imgs, params)
    out = jax.block_until_ready(out)

    ref = _reference(imgs, params)
    assert out.shape == (B, EMBED)
    assert jnp.allclose(out, ref, atol=2e-3, rtol=2e-3), "mismatch vs JAX reference"
    print("KERNEL_OK")
</pallas_src>

<mosaic_0001>
module attributes {stable_mosaic.version = 11 : i64} {
  func.func @_encoder_kernel(%arg0: i32, %arg1: memref<8x3xf32, #tpu.memory_space<vmem>>, %arg2: memref<3x2048xf32, #tpu.memory_space<vmem>>, %arg3: memref<2048x128xbf16, #tpu.memory_space<vmem>>, %arg4: memref<2x128xf32, #tpu.memory_space<vmem>>, %arg5: memref<8x128xf32, #tpu.memory_space<vmem>>) attributes {dimension_semantics = [#tpu.dimension_semantics<arbitrary>], iteration_bounds = array<i64: 1>, scalar_prefetch = 0 : i64, scratch_operands = 0 : i64, tpu.core_type = #tpu.core_type<tc>, window_params = [{pipeline_mode = #tpu.pipeline_mode<synchronous>, transform_indices = @transform_0, window_bounds = array<i64: 8, 3>}, {pipeline_mode = #tpu.pipeline_mode<synchronous>, transform_indices = @transform_1, window_bounds = array<i64: 3, 2048>}, {pipeline_mode = #tpu.pipeline_mode<synchronous>, transform_indices = @transform_2, window_bounds = array<i64: 2048, 128>}, {pipeline_mode = #tpu.pipeline_mode<synchronous>, transform_indices = @transform_3, window_bounds = array<i64: 2, 128>}, {pipeline_mode = #tpu.pipeline_mode<synchronous>, transform_indices = @transform_4, window_bounds = array<i64: 8, 128>}]} {
    %c0 = arith.constant 0 : index
    %c0_0 = arith.constant 0 : index
    %0 = vector.load %arg1[%c0, %c0_0] : memref<8x3xf32, #tpu.memory_space<vmem>>, vector<8x1xf32>
    %c0_1 = arith.constant 0 : index
    %c0_2 = arith.constant 0 : index
    %1 = vector.load %arg2[%c0_1, %c0_2] : memref<3x2048xf32, #tpu.memory_space<vmem>>, vector<1x2048xf32>
    %2 = vector.broadcast %0 : vector<8x1xf32> to vector<8x2048xf32>
    %3 = vector.broadcast %1 : vector<1x2048xf32> to vector<8x2048xf32>
    %4 = arith.mulf %2, %3 : vector<8x2048xf32>
    %c0_3 = arith.constant 0 : index
    %c1 = arith.constant 1 : index
    %5 = vector.load %arg1[%c0_3, %c1] : memref<8x3xf32, #tpu.memory_space<vmem>>, vector<8x1xf32>
    %c1_4 = arith.constant 1 : index
    %c0_5 = arith.constant 0 : index
    %6 = vector.load %arg2[%c1_4, %c0_5] : memref<3x2048xf32, #tpu.memory_space<vmem>>, vector<1x2048xf32>
    %7 = vector.broadcast %5 : vector<8x1xf32> to vector<8x2048xf32>
    %8 = vector.broadcast %6 : vector<1x2048xf32> to vector<8x2048xf32>
    %9 = arith.mulf %7, %8 : vector<8x2048xf32>
    %10 = arith.addf %4, %9 : vector<8x2048xf32>
    %c0_6 = arith.constant 0 : index
    %c2 = arith.constant 2 : index
    %11 = vector.load %arg1[%c0_6, %c2] : memref<8x3xf32, #tpu.memory_space<vmem>>, vector<8x1xf32>
    %c2_7 = arith.constant 2 : index
    %c0_8 = arith.constant 0 : index
    %12 = vector.load %arg2[%c2_7, %c0_8] : memref<3x2048xf32, #tpu.memory_space<vmem>>, vector<1x2048xf32>
    %13 = vector.broadcast %11 : vector<8x1xf32> to vector<8x2048xf32>
    %14 = vector.broadcast %12 : vector<1x2048xf32> to vector<8x2048xf32>
    %15 = arith.mulf %13, %14 : vector<8x2048xf32>
    %16 = arith.addf %10, %15 : vector<8x2048xf32>
    %17 = arith.truncf %16 : vector<8x2048xf32> to vector<8x2048xbf16>
    %c0_9 = arith.constant 0 : index
    %c0_10 = arith.constant 0 : index
    %18 = vector.load %arg3[%c0_9, %c0_10] : memref<2048x128xbf16, #tpu.memory_space<vmem>>, vector<2048x128xbf16>
    %cst = arith.constant dense<0.000000e+00> : vector<8x128xf32>
    %19 = tpu.matmul %17, %18, %cst {dimension_numbers = #tpu.dot_dimension_numbers<[1], [0], [0], [1], [0, 0, 1, 1], [], []>} : vector<8x2048xbf16>, vector<2048x128xbf16>, vector<8x128xf32> -> vector<8x128xf32>
    %cst_11 = arith.constant dense<0.000000e+00> : vector<128xf32>
    %20 = vector.multi_reduction <add>, %19, %cst_11 [0] : vector<8x128xf32> to vector<128xf32>
    %21 = vector.shape_cast %20 : vector<128xf32> to vector<1x128xf32>
    %cst_12 = arith.constant 8.000000e+00 : f32
    %22 = vector.broadcast %cst_12 : f32 to vector<1x128xf32>
    %23 = arith.divf %21, %22 : vector<1x128xf32>
    %24 = vector.broadcast %23 : vector<1x128xf32> to vector<8x128xf32>
    %25 = arith.subf %19, %24 : vector<8x128xf32>
    %26 = arith.mulf %25, %25 : vector<8x128xf32>
    %cst_13 = arith.constant dense<0.000000e+00> : vector<128xf32>
    %27 = vector.multi_reduction <add>, %26, %cst_13 [0] : vector<8x128xf32> to vector<128xf32>
    %28 = vector.shape_cast %27 : vector<128xf32> to vector<1x128xf32>
    %cst_14 = arith.constant 8.000000e+00 : f32
    %29 = vector.broadcast %cst_14 : f32 to vector<1x128xf32>
    %30 = arith.divf %28, %29 : vector<1x128xf32>
    %31 = vector.broadcast %23 : vector<1x128xf32> to vector<8x128xf32>
    %32 = arith.subf %19, %31 : vector<8x128xf32>
    %cst_15 = arith.constant 9.99999974E-6 : f32
    %33 = vector.broadcast %cst_15 : f32 to vector<1x128xf32>
    %34 = arith.addf %30, %33 : vector<1x128xf32>
    %35 = math.rsqrt %34 : vector<1x128xf32>
    %36 = vector.broadcast %35 : vector<1x128xf32> to vector<8x128xf32>
    %37 = arith.mulf %32, %36 : vector<8x128xf32>
    %c0_16 = arith.constant 0 : index
    %c0_17 = arith.constant 0 : index
    %38 = vector.load %arg4[%c0_16, %c0_17] : memref<2x128xf32, #tpu.memory_space<vmem>>, vector<1x128xf32>
    %c1_18 = arith.constant 1 : index
    %c0_19 = arith.constant 0 : index
    %39 = vector.load %arg4[%c1_18, %c0_19] : memref<2x128xf32, #tpu.memory_space<vmem>>, vector<1x128xf32>
    %40 = vector.broadcast %38 : vector<1x128xf32> to vector<8x128xf32>
    %41 = arith.mulf %37, %40 : vector<8x128xf32>
    %42 = vector.broadcast %39 : vector<1x128xf32> to vector<8x128xf32>
    %43 = arith.addf %41, %42 : vector<8x128xf32>
    %c0_20 = arith.constant 0 : index
    %c0_21 = arith.constant 0 : index
    %44 = vector.load %arg5[%c0_20, %c0_21] : memref<8x128xf32, #tpu.memory_space<vmem>>, vector<8x128xf32>
    tpu.vector_store %arg5[%c0_20, %c0_21], %43 {strides = array<i32>} : memref<8x128xf32, #tpu.memory_space<vmem>>, vector<8x128xf32>,
    return
  }
  func.func @transform_0(%arg0: i32) -> (i32, i32) {
    %c0_i32 = arith.constant 0 : i32
    %c0_i32_0 = arith.constant 0 : i32
    %c0_i32_1 = arith.constant 0 : i32
    return %c0_i32, %c0_i32_0 : i32, i32
  }
  func.func @transform_1(%arg0: i32) -> (i32, i32) {
    %c0_i32 = arith.constant 0 : i32
    %c0_i32_0 = arith.constant 0 : i32
    %c0_i32_1 = arith.constant 0 : i32
    return %c0_i32, %c0_i32_0 : i32, i32
  }
  func.func @transform_2(%arg0: i32) -> (i32, i32) {
    %c0_i32 = arith.constant 0 : i32
    %c0_i32_0 = arith.constant 0 : i32
    %c0_i32_1 = arith.constant 0 : i32
    return %c0_i32, %c0_i32_0 : i32, i32
  }
  func.func @transform_3(%arg0: i32) -> (i32, i32) {
    %c0_i32 = arith.constant 0 : i32
    %c0_i32_0 = arith.constant 0 : i32
    %c0_i32_1 = arith.constant 0 : i32
    return %c0_i32, %c0_i32_0 : i32, i32
  }
  func.func @transform_4(%arg0: i32) -> (i32, i32) {
    %c0_i32 = arith.constant 0 : i32
    %c0_i32_0 = arith.constant 0 : i32
    %c0_i32_1 = arith.constant 0 : i32
    return %c0_i32, %c0_i32_0 : i32, i32
  }
}

</mosaic_0001>

<llo_original>
// kernel: encoder_forward.1
$region0: #{encoder_forward.1}
  #allocation0 [shape = 'u32[]', space=smem, size = 0x4, offset = 0x4, fixed_abs, tag = 'smem constant byte address 0x4 - core index']
  #allocation1 [shape = 'u32[72,128]{1,0:T(1,128)}', space=vmem, size = 0x9000, scoped, tag = 'internal scratch']
  %s0 = inlined_call_operand.vmem [shape: f32[8,3], index: 0, kind: input, shape index: {}]
  %s1 = inlined_call_operand.vmem [shape: f32[3,2048], index: 1, kind: input, shape index: {}]
  %s2 = inlined_call_operand.hbm [shape: bf16[2048,128], index: 2, kind: input, shape index: {}]
  %s3 = inlined_call_operand.vmem [shape: f32[2,128], index: 3, kind: input, shape index: {}]
  %s4 = inlined_call_operand.hbm [shape: f32[8,128], index: 4, kind: output, shape index: {}]
  %s5 = sld [smem:[#allocation0]]
  $region30: #{encoder_forward.1} parent=0
    _
  %s7 = ssub.s32 1, %s5
  %s8 = scalar_select 0, %s7, %s5
  $region1: #{encoder_forward.1} parent=0
    #allocation2 [shape = 'u8[524288]{0}', space=vmem, size = 0x80000, scoped, tag = 'input window, operand 2, single buffered']
    #allocation3 [shape = 's32[1]{0}', space=sflag, size = 0x4, scoped, tag = 'scoped memory for encoder_forward.1']
    #allocation4 [shape = 's32[1]{0}', space=sflag, size = 0x4, scoped, tag = 'scoped memory for encoder_forward.1']
    #allocation5 [shape = 'u8[4096]{0}', space=vmem, size = 0x1000, scoped, tag = 'output window, operand 0, single buffered']
    %9 = vsyncpa [#allocation3], 0
    %10 = vsyncpa [#allocation4], 0
    // Predicated region
    $region2: #{encoder_forward.1} parent=1 // pred_check
      _
    $region3: #{encoder_forward.1} parent=1 // pred_check_branch
      %12 = sbr.rel (0) target = $region5
    $region4: #{encoder_forward.1} parent=1 // pred_region
      _
    $region5: #{encoder_forward.1} parent=1 // pred_fallthru
      _
    // Predicated region
    $region6: #{encoder_forward.1} parent=1 // pred_check
      _
    $region7: #{encoder_forward.1} parent=1 // pred_check_branch
      %14 = sbr.rel (0) target = $region9
    $region8: #{encoder_forward.1} parent=1 // pred_region
      _
    $region9: #{encoder_forward.1} parent=1 // pred_fallthru
      _
    // Predicated region
    $region10: #{encoder_forward.1} parent=1 // pred_check
      _
    $region11: #{encoder_forward.1} parent=1 // pred_check_branch
      %16 = sbr.rel (0) target = $region13
    $region12: #{encoder_forward.1} parent=1 // pred_region
      %18 = vsyncadd [#allocation3], 0
      %s19 = sshll.u32 %s2, 4
      %s20 = int_to_ptr.hbm [resolvable:$true] %s19
      %s21 = sshll.u32 [#allocation2], 4
      %s22 = int_to_ptr.vmem [resolvable:$true] %s21
      %27 = dma.hbm_to_vmem [thread:$0]  %s20, 16384, %s22, [#allocation3], 64, 64, 4
    $region13: #{encoder_forward.1} parent=1 // pred_fallthru
      _
    // Predicated region
    $region14: #{encoder_forward.1} parent=1 // pred_check
      _
    $region15: #{encoder_forward.1} parent=1 // pred_check_branch
      %29 = sbr.rel (0) target = $region17
    $region16: #{encoder_forward.1} parent=1 // pred_region
      _
    $region17: #{encoder_forward.1} parent=1 // pred_fallthru
      _
    // Predicated region
    $region18: #{encoder_forward.1} parent=1 // pred_check
      _
    $region19: #{encoder_forward.1} parent=1 // pred_check_branch
      %31 = sbr.rel (0) target = $region21
    $region20: #{encoder_forward.1} parent=1 // pred_region
      %33 = dma.done [#allocation3], 16384
    $region21: #{encoder_forward.1} parent=1 // pred_fallthru
      _
    %v34 = vld [vmem:[%s0] sm:$0xff]
    %v35 = vld [vmem:[%s1] ss:$4 sm:$0xff]
    %s36 = scalar_lea.vmem %s1, 32
    %v37 = vld [vmem:[%s36] ss:$4 sm:$0xff]
    %39 = vset.pattern.permute.xlu0 0
    %40 = vperm.xlu0 %39, %v34
    %v41 = vpop.permute.xlu0 %40
    %v45 = vperm.slane %v35, 0
    %v46 = vperm.slane %v35, 1
    %v47 = vperm.slane %v35, 2
    %v48 = vperm.slane %v35, 3
    %v49 = vperm.slane %v35, 4
    %v50 = vperm.slane %v35, 5
    %v51 = vperm.slane %v35, 6
    %v52 = vperm.slane %v35, 7
    %v53 = vperm.slane %v37, 0
    %v54 = vperm.slane %v37, 1
    %v55 = vperm.slane %v37, 2
    %v56 = vperm.slane %v37, 3
    %v57 = vperm.slane %v37, 4
    %v58 = vperm.slane %v37, 5
    %v59 = vperm.slane %v37, 6
    %v60 = vperm.slane %v37, 7
    %v77 = vmul.f32 %v41, %v45
    %v78 = vmul.f32 %v41, %v46
    %v79 = vmul.f32 %v41, %v47
    %v80 = vmul.f32 %v41, %v48
    %v81 = vmul.f32 %v41, %v49
    %v82 = vmul.f32 %v41, %v50
    %v83 = vmul.f32 %v41, %v51
    %v84 = vmul.f32 %v41, %v52
    %v85 = vmul.f32 %v41, %v53
    %v86 = vmul.f32 %v41, %v54
    %v87 = vmul.f32 %v41, %v55
    %v88 = vmul.f32 %v41, %v56
    %v89 = vmul.f32 %v41, %v57
    %v90 = vmul.f32 %v41, %v58
    %v91 = vmul.f32 %v41, %v59
    %v92 = vmul.f32 %v41, %v60
    %s93 = scalar_lea.vmem %s1, 1
    %v94 = vld [vmem:[%s93] ss:$4 sm:$0xff]
    %s95 = scalar_lea.vmem %s1, 33
    %v96 = vld [vmem:[%s95] ss:$4 sm:$0xff]
    %97 = vset.pattern.permute.xlu0 1
    %98 = vperm.xlu0 %97, %v34
    %v99 = vpop.permute.xlu0 %98
    %v103 = vperm.slane %v94, 0
    %v104 = vperm.slane %v94, 1
    %v105 = vperm.slane %v94, 2
    %v106 = vperm.slane %v94, 3
    %v107 = vperm.slane %v94, 4
    %v108 = vperm.slane %v94, 5
    %v109 = vperm.slane %v94, 6
    %v110 = vperm.slane %v94, 7
    %v111 = vperm.slane %v96, 0
    %v112 = vperm.slane %v96, 1
    %v113 = vperm.slane %v96, 2
    %v114 = vperm.slane %v96, 3
    %v115 = vperm.slane %v96, 4
    %v116 = vperm.slane %v96, 5
    %v117 = vperm.slane %v96, 6
    %v118 = vperm.slane %v96, 7
    %v135 = vmul.f32 %v99, %v103
    %v136 = vmul.f32 %v99, %v104
    %v137 = vmul.f32 %v99, %v105
    %v138 = vmul.f32 %v99, %v106
    %v139 = vmul.f32 %v99, %v107
    %v140 = vmul.f32 %v99, %v108
    %v141 = vmul.f32 %v99, %v109
    %v142 = vmul.f32 %v99, %v110
    %v143 = vmul.f32 %v99, %v111
    %v144 = vmul.f32 %v99, %v112
    %v145 = vmul.f32 %v99, %v113
    %v146 = vmul.f32 %v99, %v114
    %v147 = vmul.f32 %v99, %v115
    %v148 = vmul.f32 %v99, %v116
    %v149 = vmul.f32 %v99, %v117
    %v150 = vmul.f32 %v99, %v118
    %v151 = vadd.f32 %v77, %v135
    %v152 = vadd.f32 %v78, %v136
    %v153 = vadd.f32 %v79, %v137
    %v154 = vadd.f32 %v80, %v138
    %v155 = vadd.f32 %v81, %v139
    %v156 = vadd.f32 %v82, %v140
    %v157 = vadd.f32 %v83, %v141
    %v158 = vadd.f32 %v84, %v142
    %v159 = vadd.f32 %v85, %v143
    %v160 = vadd.f32 %v86, %v144
    %v161 = vadd.f32 %v87, %v145
    %v162 = vadd.f32 %v88, %v146
    %v163 = vadd.f32 %v89, %v147
    %v164 = vadd.f32 %v90, %v148
    %v165 = vadd.f32 %v91, %v149
    %v166 = vadd.f32 %v92, %v150
    %s167 = scalar_lea.vmem %s1, 2
    %v168 = vld [vmem:[%s167] ss:$4 sm:$0xff]
    %s169 = scalar_lea.vmem %s1, 34
    %v170 = vld [vmem:[%s169] ss:$4 sm:$0xff]
    %171 = vset.pattern.permute.xlu0 2
    %172 = vperm.xlu0 %171, %v34
    %v173 = vpop.permute.xlu0 %172
    %v177 = vperm.slane %v168, 0
    %v178 = vperm.slane %v168, 1
    %v179 = vperm.slane %v168, 2
    %v180 = vperm.slane %v168, 3
    %v181 = vperm.slane %v168, 4
    %v182 = vperm.slane %v168, 5
    %v183 = vperm.slane %v168, 6
    %v184 = vperm.slane %v168, 7
    %v185 = vperm.slane %v170, 0
    %v186 = vperm.slane %v170, 1
    %v187 = vperm.slane %v170, 2
    %v188 = vperm.slane %v170, 3
    %v189 = vperm.slane %v170, 4
    %v190 = vperm.slane %v170, 5
    %v191 = vperm.slane %v170, 6
    %v192 = vperm.slane %v170, 7
    %v209 = vmul.f32 %v173, %v177
    %v210 = vmul.f32 %v173, %v178
    %v211 = vmul.f32 %v173, %v179
    %v212 = vmul.f32 %v173, %v180
    %v213 = vmul.f32 %v173, %v181
    %v214 = vmul.f32 %v173, %v182
    %v215 = vmul.f32 %v173, %v183
    %v216 = vmul.f32 %v173, %v184
    %v217 = vmul.f32 %v173, %v185
    %v218 = vmul.f32 %v173, %v186
    %v219 = vmul.f32 %v173, %v187
    %v220 = vmul.f32 %v173, %v188
    %v221 = vmul.f32 %v173, %v189
    %v222 = vmul.f32 %v173, %v190
    %v223 = vmul.f32 %v173, %v191
    %v224 = vmul.f32 %v173, %v192
    %v225 = vadd.f32 %v151, %v209
    %v226 = vadd.f32 %v152, %v210
    %v227 = vadd.f32 %v153, %v211
    %v228 = vadd.f32 %v154, %v212
    %v229 = vadd.f32 %v155, %v213
    %v230 = vadd.f32 %v156, %v214
    %v231 = vadd.f32 %v157, %v215
    %v232 = vadd.f32 %v158, %v216
    %v233 = vadd.f32 %v159, %v217
    %v234 = vadd.f32 %v160, %v218
    %v235 = vadd.f32 %v161, %v219
    %v236 = vadd.f32 %v162, %v220
    %v237 = vadd.f32 %v163, %v221
    %v238 = vadd.f32 %v164, %v222
    %v239 = vadd.f32 %v165, %v223
    %v240 = vadd.f32 %v166, %v224
    %v241 = vpack.c.bf16 %v225, %v225
    %v242 = vpack.c.bf16 %v226, %v226
    %v243 = vpack.c.bf16 %v227, %v227
    %v244 = vpack.c.bf16 %v228, %v228
    %v245 = vpack.c.bf16 %v229, %v229
    %v246 = vpack.c.bf16 %v230, %v230
    %v247 = vpack.c.bf16 %v231, %v231
    %v248 = vpack.c.bf16 %v232, %v232
    %v249 = vpack.c.bf16 %v233, %v233
    %v250 = vpack.c.bf16 %v234, %v234
    %v251 = vpack.c.bf16 %v235, %v235
    %v252 = vpack.c.bf16 %v236, %v236
    %v253 = vpack.c.bf16 %v237, %v237
    %v254 = vpack.c.bf16 %v238, %v238
    %v255 = vpack.c.bf16 %v239, %v239
    %v256 = vpack.c.bf16 %v240, %v240
    %v257 = vld [vmem:[#allocation2] sm:$0xf]
    %v258 = vld [vmem:[#allocation2 + $0x4] sm:$0xf]
    %v259 = vld [vmem:[#allocation2 + $0x8] sm:$0xf]
    %v260 = vld [vmem:[#allocation2 + $0xc] sm:$0xf]
    %v261 = vld [vmem:[#allocation2 + $0x10] sm:$0xf]
    %v262 = vld [vmem:[#allocation2 + $0x14] sm:$0xf]
    %v263 = vld [vmem:[#allocation2 + $0x18] sm:$0xf]
    %v264 = vld [vmem:[#allocation2 + $0x1c] sm:$0xf]
    %v265 = vld [vmem:[#allocation2 + $0x20] sm:$0xf]
    %v266 = vld [vmem:[#allocation2 + $0x24] sm:$0xf]
    %v267 = vld [vmem:[#allocation2 + $0x28] sm:$0xf]
    %v268 = vld [vmem:[#allocation2 + $0x2c] sm:$0xf]
    %v269 = vld [vmem:[#allocation2 + $0x30] sm:$0xf]
    %v270 = vld [vmem:[#allocation2 + $0x34] sm:$0xf]
    %v271 = vld [vmem:[#allocation2 + $0x38] sm:$0xf]
    %v272 = vld [vmem:[#allocation2 + $0x3c] sm:$0xf]
    %v273 = vld [vmem:[#allocation2 + $0x40] sm:$0xf]
    %v274 = vld [vmem:[#allocation2 + $0x44] sm:$0xf]
    %v275 = vld [vmem:[#allocation2 + $0x48] sm:$0xf]
    %v276 = vld [vmem:[#allocation2 + $0x4c] sm:$0xf]
    %v277 = vld [vmem:[#allocation2 + $0x50] sm:$0xf]
    %v278 = vld [vmem:[#allocation2 + $0x54] sm:$0xf]
    %v279 = vld [vmem:[#allocation2 + $0x58] sm:$0xf]
    %v280 = vld [vmem:[#allocation2 + $0x5c] sm:$0xf]
    %v281 = vld [vmem:[#allocation2 + $0x60] sm:$0xf]
    %v282 = vld [vmem:[#allocation2 + $0x64] sm:$0xf]
    %v283 = vld [vmem:[#allocation2 + $0x68] sm:$0xf]
    %v284 = vld [vmem:[#allocation2 + $0x6c] sm:$0xf]
    %v285 = vld [vmem:[#allocation2 + $0x70] sm:$0xf]
    %v286 = vld [vmem:[#allocation2 + $0x74] sm:$0xf]
    %v287 = vld [vmem:[#allocation2 + $0x78] sm:$0xf]
    %v288 = vld [vmem:[#allocation2 + $0x7c] sm:$0xf]
    %v289 = vld [vmem:[#allocation2 + $0x80] sm:$0xf]
    %v290 = vld [vmem:[#allocation2 + $0x84] sm:$0xf]
    %v291 = vld [vmem:[#allocation2 + $0x88] sm:$0xf]
    %v292 = vld [vmem:[#allocation2 + $0x8c] sm:$0xf]
    %v293 = vld [vmem:[#allocation2 + $0x90] sm:$0xf]
    %v294 = vld [vmem:[#allocation2 + $0x94] sm:$0xf]
    %v295 = vld [vmem:[#allocation2 + $0x98] sm:$0xf]
    %v296 = vld [vmem:[#allocation2 + $0x9c] sm:$0xf]
    %v297 = vld [vmem:[#allocation2 + $0xa0] sm:$0xf]
    %v298 = vld [vmem:[#allocation2 + $0xa4] sm:$0xf]
    %v299 = vld [vmem:[#allocation2 + $0xa8] sm:$0xf]
    %v300 = vld [vmem:[#allocation2 + $0xac] sm:$0xf]
    %v301 = vld [vmem:[#allocation2 + $0xb0] sm:$0xf]
    %v302 = vld [vmem:[#allocation2 + $0xb4] sm:$0xf]
    %v303 = vld [vmem:[#allocation2 + $0xb8] sm:$0xf]
    %v304 = vld [vmem:[#allocation2 + $0xbc] sm:$0xf]
    %v305 = vld [vmem:[#allocation2 + $0xc0] sm:$0xf]
    %v306 = vld [vmem:[#allocation2 + $0xc4] sm:$0xf]
    %v307 = vld [vmem:[#allocation2 + $0xc8] sm:$0xf]
    %v308 = vld [vmem:[#allocation2 + $0xcc] sm:$0xf]
    %v309 = vld [vmem:[#allocation2 + $0xd0] sm:$0xf]
    %v310 = vld [vmem:[#allocation2 + $0xd4] sm:$0xf]
    %v311 = vld [vmem:[#allocation2 + $0xd8] sm:$0xf]
    %v312 = vld [vmem:[#allocation2 + $0xdc] sm:$0xf]
    %v313 = vld [vmem:[#allocation2 + $0xe0] sm:$0xf]
    %v314 = vld [vmem:[#allocation2 + $0xe4] sm:$0xf]
    %v315 = vld [vmem:[#allocation2 + $0xe8] sm:$0xf]
    %v316 = vld [vmem:[#allocation2 + $0xec] sm:$0xf]
    %v317 = vld [vmem:[#allocation2 + $0xf0] sm:$0xf]
    %v318 = vld [vmem:[#allocation2 + $0xf4] sm:$0xf]
    %v319 = vld [vmem:[#allocation2 + $0xf8] sm:$0xf]
    %v320 = vld [vmem:[#allocation2 + $0xfc] sm:$0xf]
    %v321 = vld [vmem:[#allocation2 + $0x100] sm:$0xf]
    %v322 = vld [vmem:[#allocation2 + $0x104] sm:$0xf]
    %v323 = vld [vmem:[#allocation2 + $0x108] sm:$0xf]
    %v324 = vld [vmem:[#allocation2 + $0x10c] sm:$0xf]
    %v325 = vld [vmem:[#allocation2 + $0x110] sm:$0xf]
    %v326 = vld [vmem:[#allocation2 + $0x114] sm:$0xf]
    %v327 = vld [vmem:[#allocation2 + $0x118] sm:$0xf]
    %v328 = vld [vmem:[#allocation2 + $0x11c] sm:$0xf]
    %v329 = vld [vmem:[#allocation2 + $0x120] sm:$0xf]
    %v330 = vld [vmem:[#allocation2 + $0x124] sm:$0xf]
    %v331 = vld [vmem:[#allocation2 + $0x128] sm:$0xf]
    %v332 = vld [vmem:[#allocation2 + $0x12c] sm:$0xf]
    %v333 = vld [vmem:[#allocation2 + $0x130] sm:$0xf]
    %v334 = vld [vmem:[#allocation2 + $0x134] sm:$0xf]
    %v335 = vld [vmem:[#allocation2 + $0x138] sm:$0xf]
    %v336 = vld [vmem:[#allocation2 + $0x13c] sm:$0xf]
    %v337 = vld [vmem:[#allocation2 + $0x140] sm:$0xf]
    %v338 = vld [vmem:[#allocation2 + $0x144] sm:$0xf]
    %v339 = vld [vmem:[#allocation2 + $0x148] sm:$0xf]
    %v340 = vld [vmem:[#allocation2 + $0x14c] sm:$0xf]
    %v341 = vld [vmem:[#allocation2 + $0x150] sm:$0xf]
    %v342 = vld [vmem:[#allocation2 + $0x154] sm:$0xf]
    %v343 = vld [vmem:[#allocation2 + $0x158] sm:$0xf]
    %v344 = vld [vmem:[#allocation2 + $0x15c] sm:$0xf]
    %v345 = vld [vmem:[#allocation2 + $0x160] sm:$0xf]
    %v346 = vld [vmem:[#allocation2 + $0x164] sm:$0xf]
    %v347 = vld [vmem:[#allocation2 + $0x168] sm:$0xf]
    %v348 = vld [vmem:[#allocation2 + $0x16c] sm:$0xf]
    %v349 = vld [vmem:[#allocation2 + $0x170] sm:$0xf]
    %v350 = vld [vmem:[#allocation2 + $0x174] sm:$0xf]
    %v351 = vld [vmem:[#allocation2 + $0x178] sm:$0xf]
    %v352 = vld [vmem:[#allocation2 + $0x17c] sm:$0xf]
    %v353 = vld [vmem:[#allocation2 + $0x180] sm:$0xf]
    %v354 = vld [vmem:[#allocation2 + $0x184] sm:$0xf]
    %v355 = vld [vmem:[#allocation2 + $0x188] sm:$0xf]
    %v356 = vld [vmem:[#allocation2 + $0x18c] sm:$0xf]
    %v357 = vld [vmem:[#allocation2 + $0x190] sm:$0xf]
    %v358 = vld [vmem:[#allocation2 + $0x194] sm:$0xf]
    %v359 = vld [vmem:[#allocation2 + $0x198] sm:$0xf]
    %v360 = vld [vmem:[#allocation2 + $0x19c] sm:$0xf]
    %v361 = vld [vmem:[#allocation2 + $0x1a0] sm:$0xf]
    %v362 = vld [vmem:[#allocation2 + $0x1a4] sm:$0xf]
    %v363 = vld [vmem:[#allocation2 + $0x1a8] sm:$0xf]
    %v364 = vld [vmem:[#allocation2 + $0x1ac] sm:$0xf]
    %v365 = vld [vmem:[#allocation2 + $0x1b0] sm:$0xf]
    %v366 = vld [vmem:[#allocation2 + $0x1b4] sm:$0xf]
    %v367 = vld [vmem:[#allocation2 + $0x1b8] sm:$0xf]
    %v368 = vld [vmem:[#allocation2 + $0x1bc] sm:$0xf]
    %v369 = vld [vmem:[#allocation2 + $0x1c0] sm:$0xf]
    %v370 = vld [vmem:[#allocation2 + $0x1c4] sm:$0xf]
    %v371 = vld [vmem:[#allocation2 + $0x1c8] sm:$0xf]
    %v372 = vld [vmem:[#allocation2 + $0x1cc] sm:$0xf]
    %v373 = vld [vmem:[#allocation2 + $0x1d0] sm:$0xf]
    %v374 = vld [vmem:[#allocation2 + $0x1d4] sm:$0xf]
    %v375 = vld [vmem:[#allocation2 + $0x1d8] sm:$0xf]
    %v376 = vld [vmem:[#allocation2 + $0x1dc] sm:$0xf]
    %v377 = vld [vmem:[#allocation2 + $0x1e0] sm:$0xf]
    %v378 = vld [vmem:[#allocation2 + $0x1e4] sm:$0xf]
    %v379 = vld [vmem:[#allocation2 + $0x1e8] sm:$0xf]
    %v380 = vld [vmem:[#allocation2 + $0x1ec] sm:$0xf]
    %v381 = vld [vmem:[#allocation2 + $0x1f0] sm:$0xf]
    %v382 = vld [vmem:[#allocation2 + $0x1f4] sm:$0xf]
    %v383 = vld [vmem:[#allocation2 + $0x1f8] sm:$0xf]
    %v384 = vld [vmem:[#allocation2 + $0x1fc] sm:$0xf]
    %v385 = vld [vmem:[#allocation2 + $0x200] sm:$0xf]
    %v386 = vld [vmem:[#allocation2 + $0x204] sm:$0xf]
    %v387 = vld [vmem:[#allocation2 + $0x208] sm:$0xf]
    %v388 = vld [vmem:[#allocation2 + $0x20c] sm:$0xf]
    %v389 = vld [vmem:[#allocation2 + $0x210] sm:$0xf]
    %v390 = vld [vmem:[#allocation2 + $0x214] sm:$0xf]
    %v391 = vld [vmem:[#allocation2 + $0x218] sm:$0xf]
    %v392 = vld [vmem:[#allocation2 + $0x21c] sm:$0xf]
    %v393 = vld [vmem:[#allocation2 + $0x220] sm:$0xf]
    %v394 = vld [vmem:[#allocation2 + $0x224] sm:$0xf]
    %v395 = vld [vmem:[#allocation2 + $0x228] sm:$0xf]
    %v396 = vld [vmem:[#allocation2 + $0x22c] sm:$0xf]
    %v397 = vld [vmem:[#allocation2 + $0x230] sm:$0xf]
    %v398 = vld [vmem:[#allocation2 + $0x234] sm:$0xf]
    %v399 = vld [vmem:[#allocation2 + $0x238] sm:$0xf]
    %v400 = vld [vmem:[#allocation2 + $0x23c] sm:$0xf]
    %v401 = vld [vmem:[#allocation2 + $0x240] sm:$0xf]
    %v402 = vld [vmem:[#allocation2 + $0x244] sm:$0xf]
    %v403 = vld [vmem:[#allocation2 + $0x248] sm:$0xf]
    %v404 = vld [vmem:[#allocation2 + $0x24c] sm:$0xf]
    %v405 = vld [vmem:[#allocation2 + $0x250] sm:$0xf]
    %v406 = vld [vmem:[#allocation2 + $0x254] sm:$0xf]
    %v407 = vld [vmem:[#allocation2 + $0x258] sm:$0xf]
    %v408 = vld [vmem:[#allocation2 + $0x25c] sm:$0xf]
    %v409 = vld [vmem:[#allocation2 + $0x260] sm:$0xf]
    %v410 = vld [vmem:[#allocation2 + $0x264] sm:$0xf]
    %v411 = vld [vmem:[#allocation2 + $0x268] sm:$0xf]
    %v412 = vld [vmem:[#allocation2 + $0x26c] sm:$0xf]
    %v413 = vld [vmem:[#allocation2 + $0x270] sm:$0xf]
    %v414 = vld [vmem:[#allocation2 + $0x274] sm:$0xf]
    %v415 = vld [vmem:[#allocation2 + $0x278] sm:$0xf]
    %v416 = vld [vmem:[#allocation2 + $0x27c] sm:$0xf]
    %v417 = vld [vmem:[#allocation2 + $0x280] sm:$0xf]
    %v418 = vld [vmem:[#allocation2 + $0x284] sm:$0xf]
    %v419 = vld [vmem:[#allocation2 + $0x288] sm:$0xf]
    %v420 = vld [vmem:[#allocation2 + $0x28c] sm:$0xf]
    %v421 = vld [vmem:[#allocation2 + $0x290] sm:$0xf]
    %v422 = vld [vmem:[#allocation2 + $0x294] sm:$0xf]
    %v423 = vld [vmem:[#allocation2 + $0x298] sm:$0xf]
    %v424 = vld [vmem:[#allocation2 + $0x29c] sm:$0xf]
    %v425 = vld [vmem:[#allocation2 + $0x2a0] sm:$0xf]
    %v426 = vld [vmem:[#allocation2 + $0x2a4] sm:$0xf]
    %v427 = vld [vmem:[#allocation2 + $0x2a8] sm:$0xf]
    %v428 = vld [vmem:[#allocation2 + $0x2ac] sm:$0xf]
    %v429 = vld [vmem:[#allocation2 + $0x2b0] sm:$0xf]
    %v430 = vld [vmem:[#allocation2 + $0x2b4] sm:$0xf]
    %v431 = vld [vmem:[#allocation2 + $0x2b8] sm:$0xf]
    %v432 = vld [vmem:[#allocation2 + $0x2bc] sm:$0xf]
    %v433 = vld [vmem:[#allocation2 + $0x2c0] sm:$0xf]
    %v434 = vld [vmem:[#allocation2 + $0x2c4] sm:$0xf]
    %v435 = vld [vmem:[#allocation2 + $0x2c8] sm:$0xf]
    %v436 = vld [vmem:[#allocation2 + $0x2cc] sm:$0xf]
    %v437 = vld [vmem:[#allocation2 + $0x2d0] sm:$0xf]
    %v438 = vld [vmem:[#allocation2 + $0x2d4] sm:$0xf]
    %v439 = vld [vmem:[#allocation2 + $0x2d8] sm:$0xf]
    %v440 = vld [vmem:[#allocation2 + $0x2dc] sm:$0xf]
    %v441 = vld [vmem:[#allocation2 + $0x2e0] sm:$0xf]
    %v442 = vld [vmem:[#allocation2 + $0x2e4] sm:$0xf]
    %v443 = vld [vmem:[#allocation2 + $0x2e8] sm:$0xf]
    %v444 = vld [vmem:[#allocation2 + $0x2ec] sm:$0xf]
    %v445 = vld [vmem:[#allocation2 + $0x2f0] sm:$0xf]
    %v446 = vld [vmem:[#allocation2 + $0x2f4] sm:$0xf]
    %v447 = vld [vmem:[#allocation2 + $0x2f8] sm:$0xf]
    %v448 = vld [vmem:[#allocation2 + $0x2fc] sm:$0xf]
    %v449 = vld [vmem:[#allocation2 + $0x300] sm:$0xf]
    %v450 = vld [vmem:[#allocation2 + $0x304] sm:$0xf]
    %v451 = vld [vmem:[#allocation2 + $0x308] sm:$0xf]
    %v452 = vld [vmem:[#allocation2 + $0x30c] sm:$0xf]
    %v453 = vld [vmem:[#allocation2 + $0x310] sm:$0xf]
    %v454 = vld [vmem:[#allocation2 + $0x314] sm:$0xf]
    %v455 = vld [vmem:[#allocation2 + $0x318] sm:$0xf]
    %v456 = vld [vmem:[#allocation2 + $0x31c] sm:$0xf]
    %v457 = vld [vmem:[#allocation2 + $0x320] sm:$0xf]
    %v458 = vld [vmem:[#allocation2 + $0x324] sm:$0xf]
    %v459 = vld [vmem:[#allocation2 + $0x328] sm:$0xf]
    %v460 = vld [vmem:[#allocation2 + $0x32c] sm:$0xf]
    %v461 = vld [vmem:[#allocation2 + $0x330] sm:$0xf]
    %v462 = vld [vmem:[#allocation2 + $0x334] sm:$0xf]
    %v463 = vld [vmem:[#allocation2 + $0x338] sm:$0xf]
    %v464 = vld [vmem:[#allocation2 + $0x33c] sm:$0xf]
    %v465 = vld [vmem:[#allocation2 + $0x340] sm:$0xf]
    %v466 = vld [vmem:[#allocation2 + $0x344] sm:$0xf]
    %v467 = vld [vmem:[#allocation2 + $0x348] sm:$0xf]
    %v468 = vld [vmem:[#allocation2 + $0x34c] sm:$0xf]
    %v469 = vld [vmem:[#allocation2 + $0x350] sm:$0xf]
    %v470 = vld [vmem:[#allocation2 + $0x354] sm:$0xf]
    %v471 = vld [vmem:[#allocation2 + $0x358] sm:$0xf]
    %v472 = vld [vmem:[#allocation2 + $0x35c] sm:$0xf]
    %v473 = vld [vmem:[#allocation2 + $0x360] sm:$0xf]
    %v474 = vld [vmem:[#allocation2 + $0x364] sm:$0xf]
    %v475 = vld [vmem:[#allocation2 + $0x368] sm:$0xf]
    %v476 = vld [vmem:[#allocation2 + $0x36c] sm:$0xf]
    %v477 = vld [vmem:[#allocation2 + $0x370] sm:$0xf]
    %v478 = vld [vmem:[#allocation2 + $0x374] sm:$0xf]
    %v479 = vld [vmem:[#allocation2 + $0x378] sm:$0xf]
    %v480 = vld [vmem:[#allocation2 + $0x37c] sm:$0xf]
    %v481 = vld [vmem:[#allocation2 + $0x380] sm:$0xf]
    %v482 = vld [vmem:[#allocation2 + $0x384] sm:$0xf]
    %v483 = vld [vmem:[#allocation2 + $0x388] sm:$0xf]
    %v484 = vld [vmem:[#allocation2 + $0x38c] sm:$0xf]
    %v485 = vld [vmem:[#allocation2 + $0x390] sm:$0xf]
    %v486 = vld [vmem:[#allocation2 + $0x394] sm:$0xf]
    %v487 = vld [vmem:[#allocation2 + $0x398] sm:$0xf]
    %v488 = vld [vmem:[#allocation2 + $0x39c] sm:$0xf]
    %v489 = vld [vmem:[#allocation2 + $0x3a0] sm:$0xf]
    %v490 = vld [vmem:[#allocation2 + $0x3a4] sm:$0xf]
    %v491 = vld [vmem:[#allocation2 + $0x3a8] sm:$0xf]
    %v492 = vld [vmem:[#allocation2 + $0x3ac] sm:$0xf]
    %v493 = vld [vmem:[#allocation2 + $0x3b0] sm:$0xf]
    %v494 = vld [vmem:[#allocation2 + $0x3b4] sm:$0xf]
    %v495 = vld [vmem:[#allocation2 + $0x3b8] sm:$0xf]
    %v496 = vld [vmem:[#allocation2 + $0x3bc] sm:$0xf]
    %v497 = vld [vmem:[#allocation2 + $0x3c0] sm:$0xf]
    %v498 = vld [vmem:[#allocation2 + $0x3c4] sm:$0xf]
    %v499 = vld [vmem:[#allocation2 + $0x3c8] sm:$0xf]
    %v500 = vld [vmem:[#allocation2 + $0x3cc] sm:$0xf]
    %v501 = vld [vmem:[#allocation2 + $0x3d0] sm:$0xf]
    %v502 = vld [vmem:[#allocation2 + $0x3d4] sm:$0xf]
    %v503 = vld [vmem:[#allocation2 + $0x3d8] sm:$0xf]
    %v504 = vld [vmem:[#allocation2 + $0x3dc] sm:$0xf]
    %v505 = vld [vmem:[#allocation2 + $0x3e0] sm:$0xf]
    %v506 = vld [vmem:[#allocation2 + $0x3e4] sm:$0xf]
    %v507 = vld [vmem:[#allocation2 + $0x3e8] sm:$0xf]
    %v508 = vld [vmem:[#allocation2 + $0x3ec] sm:$0xf]
    %v509 = vld [vmem:[#allocation2 + $0x3f0] sm:$0xf]
    %v510 = vld [vmem:[#allocation2 + $0x3f4] sm:$0xf]
    %v511 = vld [vmem:[#allocation2 + $0x3f8] sm:$0xf]
    %v512 = vld [vmem:[#allocation2 + $0x3fc] sm:$0xf]
    %v769 = vunpack.c.l.b16 %v257
    %v770 = vunpack.c.l.b16 %v258
    %v771 = vunpack.c.l.b16 %v259
    %v772 = vunpack.c.l.b16 %v260
    %v773 = vunpack.c.l.b16 %v261
    %v774 = vunpack.c.l.b16 %v262
    %v775 = vunpack.c.l.b16 %v263
    %v776 = vunpack.c.l.b16 %v264
    %v777 = vunpack.c.l.b16 %v265
    %v778 = vunpack.c.l.b16 %v266
    %v779 = vunpack.c.l.b16 %v267
    %v780 = vunpack.c.l.b16 %v268
    %v781 = vunpack.c.l.b16 %v269
    %v782 = vunpack.c.l.b16 %v270
    %v783 = vunpack.c.l.b16 %v271
    %v784 = vunpack.c.l.b16 %v272
    %v785 = vunpack.c.l.b16 %v273
    %v786 = vunpack.c.l.b16 %v274
    %v787 = vunpack.c.l.b16 %v275
    %v788 = vunpack.c.l.b16 %v276
    %v789 = vunpack.c.l.b16 %v277
    %v790 = vunpack.c.l.b16 %v278
    %v791 = vunpack.c.l.b16 %v279
    %v792 = vunpack.c.l.b16 %v280
    %v793 = vunpack.c.l.b16 %v281
    %v794 = vunpack.c.l.b16 %v282
    %v795 = vunpack.c.l.b16 %v283
    %v796 = vunpack.c.l.b16 %v284
    %v797 = vunpack.c.l.b16 %v285
    %v798 = vunpack.c.l.b16 %v286
    %v799 = vunpack.c.l.b16 %v287
    %v800 = vunpack.c.l.b16 %v288
    %v801 = vunpack.c.l.b16 %v289
    %v802 = vunpack.c.l.b16 %v290
    %v803 = vunpack.c.l.b16 %v291
    %v804 = vunpack.c.l.b16 %v292
    %v805 = vunpack.c.l.b16 %v293
    %v806 = vunpack.c.l.b16 %v294
    %v807 = vunpack.c.l.b16 %v295
    %v808 = vunpack.c.l.b16 %v296
    %v809 = vunpack.c.l.b16 %v297
    %v810 = vunpack.c.l.b16 %v298
    %v811 = vunpack.c.l.b16 %v299
    %v812 = vunpack.c.l.b16 %v300
    %v813 = vunpack.c.l.b16 %v301
    %v814 = vunpack.c.l.b16 %v302
    %v815 = vunpack.c.l.b16 %v303
    %v816 = vunpack.c.l.b16 %v304
    %v817 = vunpack.c.l.b16 %v305
    %v818 = vunpack.c.l.b16 %v306
    %v819 = vunpack.c.l.b16 %v307
    %v820 = vunpack.c.l.b16 %v308
    %v821 = vunpack.c.l.b16 %v309
    %v822 = vunpack.c.l.b16 %v310
    %v823 = vunpack.c.l.b16 %v311
    %v824 = vunpack.c.l.b16 %v312
    %v825 = vunpack.c.l.b16 %v313
    %v826 = vunpack.c.l.b16 %v314
    %v827 = vunpack.c.l.b16 %v315
    %v828 = vunpack.c.l.b16 %v316
    %v829 = vunpack.c.l.b16 %v317
    %v830 = vunpack.c.l.b16 %v318
    %v831 = vunpack.c.l.b16 %v319
    %v832 = vunpack.c.l.b16 %v320
    %v833 = vunpack.c.l.b16 %v321
    %v834 = vunpack.c.l.b16 %v322
    %v835 = vunpack.c.l.b16 %v323
    %v836 = vunpack.c.l.b16 %v324
    %v837 = vunpack.c.l.b16 %v325
    %v838 = vunpack.c.l.b16 %v326
    %v839 = vunpack.c.l.b16 %v327
    %v840 = vunpack.c.l.b16 %v328
    %v841 = vunpack.c.l.b16 %v329
    %v842 = vunpack.c.l.b16 %v330
    %v843 = vunpack.c.l.b16 %v331
    %v844 = vunpack.c.l.b16 %v332
    %v845 = vunpack.c.l.b16 %v333
    %v846 = vunpack.c.l.b16 %v334
    %v847 = vunpack.c.l.b16 %v335
    %v848 = vunpack.c.l.b16 %v336
    %v849 = vunpack.c.l.b16 %v337
    %v850 = vunpack.c.l.b16 %v338
    %v851 = vunpack.c.l.b16 %v339
    %v852 = vunpack.c.l.b16 %v340
    %v853 = vunpack.c.l.b16 %v341
    %v854 = vunpack.c.l.b16 %v342
    %v855 = vunpack.c.l.b16 %v343
    %v856 = vunpack.c.l.b16 %v344
    %v857 = vunpack.c.l.b16 %v345
    %v858 = vunpack.c.l.b16 %v346
    %v859 = vunpack.c.l.b16 %v347
    %v860 = vunpack.c.l.b16 %v348
    %v861 = vunpack.c.l.b16 %v349
    %v862 = vunpack.c.l.b16 %v350
    %v863 = vunpack.c.l.b16 %v351
    %v864 = vunpack.c.l.b16 %v352
    %v865 = vunpack.c.l.b16 %v353
    %v866 = vunpack.c.l.b16 %v354
    %v867 = vunpack.c.l.b16 %v355
    %v868 = vunpack.c.l.b16 %v356
    %v869 = vunpack.c.l.b16 %v357
    %v870 = vunpack.c.l.b16 %v358
    %v871 = vunpack.c.l.b16 %v359
    %v872 = vunpack.c.l.b16 %v360
    %v873 = vunpack.c.l.b16 %v361
    %v874 = vunpack.c.l.b16 %v362
    %v875 = vunpack.c.l.b16 %v363
    %v876 = vunpack.c.l.b16 %v364
    %v877 = vunpack.c.l.b16 %v365
    %v878 = vunpack.c.l.b16 %v366
    %v879 = vunpack.c.l.b16 %v367
    %v880 = vunpack.c.l.b16 %v368
    %v881 = vunpack.c.l.b16 %v369
    %v882 = vunpack.c.l.b16 %v370
    %v883 = vunpack.c.l.b16 %v371
    %v884 = vunpack.c.l.b16 %v372
    %v885 = vunpack.c.l.b16 %v373
    %v886 = vunpack.c.l.b16 %v374
    %v887 = vunpack.c.l.b16 %v375
    %v888 = vunpack.c.l.b16 %v376
    %v889 = vunpack.c.l.b16 %v377
    %v890 = vunpack.c.l.b16 %v378
    %v891 = vunpack.c.l.b16 %v379
    %v892 = vunpack.c.l.b16 %v380
    %v893 = vunpack.c.l.b16 %v381
    %v894 = vunpack.c.l.b16 %v382
    %v895 = vunpack.c.l.b16 %v383
    %v896 = vunpack.c.l.b16 %v384
    %v897 = vunpack.c.l.b16 %v385
    %v898 = vunpack.c.l.b16 %v386
    %v899 = vunpack.c.l.b16 %v387
    %v900 = vunpack.c.l.b16 %v388
    %v901 = vunpack.c.l.b16 %v389
    %v902 = vunpack.c.l.b16 %v390
    %v903 = vunpack.c.l.b16 %v391
    %v904 = vunpack.c.l.b16 %v392
    %v905 = vunpack.c.l.b16 %v393
    %v906 = vunpack.c.l.b16 %v394
    %v907 = vunpack.c.l.b16 %v395
    %v908 = vunpack.c.l.b16 %v396
    %v909 = vunpack.c.l.b16 %v397
    %v910 = vunpack.c.l.b16 %v398
    %v911 = vunpack.c.l.b16 %v399
    %v912 = vunpack.c.l.b16 %v400
    %v913 = vunpack.c.l.b16 %v401
    %v914 = vunpack.c.l.b16 %v402
    %v915 = vunpack.c.l.b16 %v403
    %v916 = vunpack.c.l.b16 %v404
    %v917 = vunpack.c.l.b16 %v405
    %v918 = vunpack.c.l.b16 %v406
    %v919 = vunpack.c.l.b16 %v407
    %v920 = vunpack.c.l.b16 %v408
    %v921 = vunpack.c.l.b16 %v409
    %v922 = vunpack.c.l.b16 %v410
    %v923 = vunpack.c.l.b16 %v411
    %v924 = vunpack.c.l.b16 %v412
    %v925 = vunpack.c.l.b16 %v413
    %v926 = vunpack.c.l.b16 %v414
    %v927 = vunpack.c.l.b16 %v415
    %v928 = vunpack.c.l.b16 %v416
    %v929 = vunpack.c.l.b16 %v417
    %v930 = vunpack.c.l.b16 %v418
    %v931 = vunpack.c.l.b16 %v419
    %v932 = vunpack.c.l.b16 %v420
    %v933 = vunpack.c.l.b16 %v421
    %v934 = vunpack.c.l.b16 %v422
    %v935 = vunpack.c.l.b16 %v423
    %v936 = vunpack.c.l.b16 %v424
    %v937 = vunpack.c.l.b16 %v425
    %v938 = vunpack.c.l.b16 %v426
    %v939 = vunpack.c.l.b16 %v427
    %v940 = vunpack.c.l.b16 %v428
    %v941 = vunpack.c.l.b16 %v429
    %v942 = vunpack.c.l.b16 %v430
    %v943 = vunpack.c.l.b16 %v431
    %v944 = vunpack.c.l.b16 %v432
    %v945 = vunpack.c.l.b16 %v433
    %v946 = vunpack.c.l.b16 %v434
    %v947 = vunpack.c.l.b16 %v435
    %v948 = vunpack.c.l.b16 %v436
    %v949 = vunpack.c.l.b16 %v437
    %v950 = vunpack.c.l.b16 %v438
    %v951 = vunpack.c.l.b16 %v439
    %v952 = vunpack.c.l.b16 %v440
    %v953 = vunpack.c.l.b16 %v441
    %v954 = vunpack.c.l.b16 %v442
    %v955 = vunpack.c.l.b16 %v443
    %v956 = vunpack.c.l.b16 %v444
    %v957 = vunpack.c.l.b16 %v445
    %v958 = vunpack.c.l.b16 %v446
    %v959 = vunpack.c.l.b16 %v447
    %v960 = vunpack.c.l.b16 %v448
    %v961 = vunpack.c.l.b16 %v449
    %v962 = vunpack.c.l.b16 %v450
    %v963 = vunpack.c.l.b16 %v451
    %v964 = vunpack.c.l.b16 %v452
    %v965 = vunpack.c.l.b16 %v453
    %v966 = vunpack.c.l.b16 %v454
    %v967 = vunpack.c.l.b16 %v455
    %v968 = vunpack.c.l.b16 %v456
    %v969 = vunpack.c.l.b16 %v457
    %v970 = vunpack.c.l.b16 %v458
    %v971 = vunpack.c.l.b16 %v459
    %v972 = vunpack.c.l.b16 %v460
    %v973 = vunpack.c.l.b16 %v461
    %v974 = vunpack.c.l.b16 %v462
    %v975 = vunpack.c.l.b16 %v463
    %v976 = vunpack.c.l.b16 %v464
    %v977 = vunpack.c.l.b16 %v465
    %v978 = vunpack.c.l.b16 %v466
    %v979 = vunpack.c.l.b16 %v467
    %v980 = vunpack.c.l.b16 %v468
    %v981 = vunpack.c.l.b16 %v469
    %v982 = vunpack.c.l.b16 %v470
    %v983 = vunpack.c.l.b16 %v471
    %v984 = vunpack.c.l.b16 %v472
    %v985 = vunpack.c.l.b16 %v473
    %v986 = vunpack.c.l.b16 %v474
    %v987 = vunpack.c.l.b16 %v475
    %v988 = vunpack.c.l.b16 %v476
    %v989 = vunpack.c.l.b16 %v477
    %v990 = vunpack.c.l.b16 %v478
    %v991 = vunpack.c.l.b16 %v479
    %v992 = vunpack.c.l.b16 %v480
    %v993 = vunpack.c.l.b16 %v481
    %v994 = vunpack.c.l.b16 %v482
    %v995 = vunpack.c.l.b16 %v483
    %v996 = vunpack.c.l.b16 %v484
    %v997 = vunpack.c.l.b16 %v485
    %v998 = vunpack.c.l.b16 %v486
    %v999 = vunpack.c.l.b16 %v487
    %v1000 = vunpack.c.l.b16 %v488
    %v1001 = vunpack.c.l.b16 %v489
    %v1002 = vunpack.c.l.b16 %v490
    %v1003 = vunpack.c.l.b16 %v491
    %v1004 = vunpack.c.l.b16 %v492
    %v1005 = vunpack.c.l.b16 %v493
    %v1006 = vunpack.c.l.b16 %v494
    %v1007 = vunpack.c.l.b16 %v495
    %v1008 = vunpack.c.l.b16 %v496
    %v1009 = vunpack.c.l.b16 %v497
    %v1010 = vunpack.c.l.b16 %v498
    %v1011 = vunpack.c.l.b16 %v499
    %v1012 = vunpack.c.l.b16 %v500
    %v1013 = vunpack.c.l.b16 %v501
    %v1014 = vunpack.c.l.b16 %v502
    %v1015 = vunpack.c.l.b16 %v503
    %v1016 = vunpack.c.l.b16 %v504
    %v1017 = vunpack.c.l.b16 %v505
    %v1018 = vunpack.c.l.b16 %v506
    %v1019 = vunpack.c.l.b16 %v507
    %v1020 = vunpack.c.l.b16 %v508
    %v1021 = vunpack.c.l.b16 %v509
    %v1022 = vunpack.c.l.b16 %v510
    %v1023 = vunpack.c.l.b16 %v511
    %v1024 = vunpack.c.l.b16 %v512
    %v1025 = vpack.c.b16 %v770, %v769
    %v1026 = vpack.c.b16 %v772, %v771
    %v1027 = vpack.c.b16 %v774, %v773
    %v1028 = vpack.c.b16 %v776, %v775
    %v1029 = vpack.c.b16 %v778, %v777
    %v1030 = vpack.c.b16 %v780, %v779
    %v1031 = vpack.c.b16 %v782, %v781
    %v1032 = vpack.c.b16 %v784, %v783
    %v1033 = vpack.c.b16 %v786, %v785
    %v1034 = vpack.c.b16 %v788, %v787
    %v1035 = vpack.c.b16 %v790, %v789
    %v1036 = vpack.c.b16 %v792, %v791
    %v1037 = vpack.c.b16 %v794, %v793
    %v1038 = vpack.c.b16 %v796, %v795
    %v1039 = vpack.c.b16 %v798, %v797
    %v1040 = vpack.c.b16 %v800, %v799
    %v1041 = vpack.c.b16 %v802, %v801
    %v1042 = vpack.c.b16 %v804, %v803
    %v1043 = vpack.c.b16 %v806, %v805
    %v1044 = vpack.c.b16 %v808, %v807
    %v1045 = vpack.c.b16 %v810, %v809
    %v1046 = vpack.c.b16 %v812, %v811
    %v1047 = vpack.c.b16 %v814, %v813
    %v1048 = vpack.c.b16 %v816, %v815
    %v1049 = vpack.c.b16 %v818, %v817
    %v1050 = vpack.c.b16 %v820, %v819
    %v1051 = vpack.c.b16 %v822, %v821
    %v1052 = vpack.c.b16 %v824, %v823
    %v1053 = vpack.c.b16 %v826, %v825
    %v1054 = vpack.c.b16 %v828, %v827
    %v1055 = vpack.c.b16 %v830, %v829
    %v1056 = vpack.c.b16 %v832, %v831
    %v1057 = vpack.c.b16 %v834, %v833
    %v1058 = vpack.c.b16 %v836, %v835
    %v1059 = vpack.c.b16 %v838, %v837
    %v1060 = vpack.c.b16 %v840, %v839
    %v1061 = vpack.c.b16 %v842, %v841
    %v1062 = vpack.c.b16 %v844, %v843
    %v1063 = vpack.c.b16 %v846, %v845
    %v1064 = vpack.c.b16 %v848, %v847
    %v1065 = vpack.c.b16 %v850, %v849
    %v1066 = vpack.c.b16 %v852, %v851
    %v1067 = vpack.c.b16 %v854, %v853
    %v1068 = vpack.c.b16 %v856, %v855
    %v1069 = vpack.c.b16 %v858, %v857
    %v1070 = vpack.c.b16 %v860, %v859
    %v1071 = vpack.c.b16 %v862, %v861
    %v1072 = vpack.c.b16 %v864, %v863
    %v1073 = vpack.c.b16 %v866, %v865
    %v1074 = vpack.c.b16 %v868, %v867
    %v1075 = vpack.c.b16 %v870, %v869
    %v1076 = vpack.c.b16 %v872, %v871
    %v1077 = vpack.c.b16 %v874, %v873
    %v1078 = vpack.c.b16 %v876, %v875
    %v1079 = vpack.c.b16 %v878, %v877
    %v1080 = vpack.c.b16 %v880, %v879
    %v1081 = vpack.c.b16 %v882, %v881
    %v1082 = vpack.c.b16 %v884, %v883
    %v1083 = vpack.c.b16 %v886, %v885
    %v1084 = vpack.c.b16 %v888, %v887
    %v1085 = vpack.c.b16 %v890, %v889
    %v1086 = vpack.c.b16 %v892, %v891
    %v1087 = vpack.c.b16 %v894, %v893
    %v1088 = vpack.c.b16 %v896, %v895
    %v1089 = vpack.c.b16 %v898, %v897
    %v1090 = vpack.c.b16 %v900, %v899
    %v1091 = vpack.c.b16 %v902, %v901
    %v1092 = vpack.c.b16 %v904, %v903
    %v1093 = vpack.c.b16 %v906, %v905
    %v1094 = vpack.c.b16 %v908, %v907
    %v1095 = vpack.c.b16 %v910, %v909
    %v1096 = vpack.c.b16 %v912, %v911
    %v1097 = vpack.c.b16 %v914, %v913
    %v1098 = vpack.c.b16 %v916, %v915
    %v1099 = vpack.c.b16 %v918, %v917
    %v1100 = vpack.c.b16 %v920, %v919
    %v1101 = vpack.c.b16 %v922, %v921
    %v1102 = vpack.c.b16 %v924, %v923
    %v1103 = vpack.c.b16 %v926, %v925
    %v1104 = vpack.c.b16 %v928, %v927
    %v1105 = vpack.c.b16 %v930, %v929
    %v1106 = vpack.c.b16 %v932, %v931
    %v1107 = vpack.c.b16 %v934, %v933
    %v1108 = vpack.c.b16 %v936, %v935
    %v1109 = vpack.c.b16 %v938, %v937
    %v1110 = vpack.c.b16 %v940, %v939
    %v1111 = vpack.c.b16 %v942, %v941
    %v1112 = vpack.c.b16 %v944, %v943
    %v1113 = vpack.c.b16 %v946, %v945
    %v1114 = vpack.c.b16 %v948, %v947
    %v1115 = vpack.c.b16 %v950, %v949
    %v1116 = vpack.c.b16 %v952, %v951
    %v1117 = vpack.c.b16 %v954, %v953
    %v1118 = vpack.c.b16 %v956, %v955
    %v1119 = vpack.c.b16 %v958, %v957
    %v1120 = vpack.c.b16 %v960, %v959
    %v1121 = vpack.c.b16 %v962, %v961
    %v1122 = vpack.c.b16 %v964, %v963
    %v1123 = vpack.c.b16 %v966, %v965
    %v1124 = vpack.c.b16 %v968, %v967
    %v1125 = vpack.c.b16 %v970, %v969
    %v1126 = vpack.c.b16 %v972, %v971
    %v1127 = vpack.c.b16 %v974, %v973
    %v1128 = vpack.c.b16 %v976, %v975
    %v1129 = vpack.c.b16 %v978, %v977
    %v1130 = vpack.c.b16 %v980, %v979
    %v1131 = vpack.c.b16 %v982, %v981
    %v1132 = vpack.c.b16 %v984, %v983
    %v1133 = vpack.c.b16 %v986, %v985
    %v1134 = vpack.c.b16 %v988, %v987
    %v1135 = vpack.c.b16 %v990, %v989
    %v1136 = vpack.c.b16 %v992, %v991
    %v1137 = vpack.c.b16 %v994, %v993
    %v1138 = vpack.c.b16 %v996, %v995
    %v1139 = vpack.c.b16 %v998, %v997
    %v1140 = vpack.c.b16 %v1000, %v999
    %v1141 = vpack.c.b16 %v1002, %v1001
    %v1142 = vpack.c.b16 %v1004, %v1003
    %v1143 = vpack.c.b16 %v1006, %v1005
    %v1144 = vpack.c.b16 %v1008, %v1007
    %v1145 = vpack.c.b16 %v1010, %v1009
    %v1146 = vpack.c.b16 %v1012, %v1011
    %v1147 = vpack.c.b16 %v1014, %v1013
    %v1148 = vpack.c.b16 %v1016, %v1015
    %v1149 = vpack.c.b16 %v1018, %v1017
    %v1150 = vpack.c.b16 %v1020, %v1019
    %v1151 = vpack.c.b16 %v1022, %v1021
    %v1152 = vpack.c.b16 %v1024, %v1023
    %1281 = vmatpush.bf16.msra.mxu0 %v1032
    %1282 = vmatpush.bf16.msra.mxu0 %v1031
    %1283 = vmatpush.bf16.msra.mxu0 %v1030
    %1284 = vmatpush.bf16.msra.mxu0 %v1029
    %1285 = vmatpush.bf16.msra.mxu0 %v1028
    %1286 = vmatpush.bf16.msra.mxu0 %v1027
    %1287 = vmatpush.bf16.msra.mxu0 %v1026
    %1288 = vmatpush.bf16.msra.mxu0 %v1025
    %1289 = vmatmul.bf16.gmra.mxu0 %v241
    %v1290 = vpop.f32.mrf.mxu0
    %v1291 = vadd.f32 0.0, %v1290
    %v1292 = vpop.f32.mrf.mxu0
    %1293 = vdwg.mxu0
    %1294 = vmatpush.bf16.msra.mxu0 %v1040
    %1295 = vmatpush.bf16.msra.mxu0 %v1039
    %1296 = vmatpush.bf16.msra.mxu0 %v1038
    %1297 = vmatpush.bf16.msra.mxu0 %v1037
    %1298 = vmatpush.bf16.msra.mxu0 %v1036
    %1299 = vmatpush.bf16.msra.mxu0 %v1035
    %1300 = vmatpush.bf16.msra.mxu0 %v1034
    %1301 = vmatpush.bf16.msra.mxu0 %v1033
    %1302 = vmatmul.bf16.gmra.mxu0 %v242
    %v1303 = vpop.f32.mrf.mxu0
    %v1304 = vadd.f32 %v1291, %v1303
    %v1305 = vpop.f32.mrf.mxu0
    %1306 = vdwg.mxu0
    %1307 = vmatpush.bf16.msra.mxu0 %v1048
    %1308 = vmatpush.bf16.msra.mxu0 %v1047
    %1309 = vmatpush.bf16.msra.mxu0 %v1046
    %1310 = vmatpush.bf16.msra.mxu0 %v1045
    %1311 = vmatpush.bf16.msra.mxu0 %v1044
    %1312 = vmatpush.bf16.msra.mxu0 %v1043
    %1313 = vmatpush.bf16.msra.mxu0 %v1042
    %1314 = vmatpush.bf16.msra.mxu0 %v1041
    %1315 = vmatmul.bf16.gmra.mxu0 %v243
    %v1316 = vpop.f32.mrf.mxu0
    %v1317 = vadd.f32 %v1304, %v1316
    %v1318 = vpop.f32.mrf.mxu0
    %1319 = vdwg.mxu0
    %1320 = vmatpush.bf16.msra.mxu0 %v1056
    %1321 = vmatpush.bf16.msra.mxu0 %v1055
    %1322 = vmatpush.bf16.msra.mxu0 %v1054
    %1323 = vmatpush.bf16.msra.mxu0 %v1053
    %1324 = vmatpush.bf16.msra.mxu0 %v1052
    %1325 = vmatpush.bf16.msra.mxu0 %v1051
    %1326 = vmatpush.bf16.msra.mxu0 %v1050
    %1327 = vmatpush.bf16.msra.mxu0 %v1049
    %1328 = vmatmul.bf16.gmra.mxu0 %v244
    %v1329 = vpop.f32.mrf.mxu0
    %v1330 = vadd.f32 %v1317, %v1329
    %v1331 = vpop.f32.mrf.mxu0
    %1332 = vdwg.mxu0
    %1333 = vmatpush.bf16.msra.mxu0 %v1064
    %1334 = vmatpush.bf16.msra.mxu0 %v1063
    %1335 = vmatpush.bf16.msra.mxu0 %v1062
    %1336 = vmatpush.bf16.msra.mxu0 %v1061
    %1337 = vmatpush.bf16.msra.mxu0 %v1060
    %1338 = vmatpush.bf16.msra.mxu0 %v1059
    %1339 = vmatpush.bf16.msra.mxu0 %v1058
    %1340 = vmatpush.bf16.msra.mxu0 %v1057
    %1341 = vmatmul.bf16.gmra.mxu0 %v245
    %v1342 = vpop.f32.mrf.mxu0
    %v1343 = vadd.f32 %v1330, %v1342
    %v1344 = vpop.f32.mrf.mxu0
    %1345 = vdwg.mxu0
    %1346 = vmatpush.bf16.msra.mxu0 %v1072
    %1347 = vmatpush.bf16.msra.mxu0 %v1071
    %1348 = vmatpush.bf16.msra.mxu0 %v1070
    %1349 = vmatpush.bf16.msra.mxu0 %v1069
    %1350 = vmatpush.bf16.msra.mxu0 %v1068
    %1351 = vmatpush.bf16.msra.mxu0 %v1067
    %1352 = vmatpush.bf16.msra.mxu0 %v1066
    %1353 = vmatpush.bf16.msra.mxu0 %v1065
    %1354 = vmatmul.bf16.gmra.mxu0 %v246
    %v1355 = vpop.f32.mrf.mxu0
    %v1356 = vadd.f32 %v1343, %v1355
    %v1357 = vpop.f32.mrf.mxu0
    %1358 = vdwg.mxu0
    %1359 = vmatpush.bf16.msra.mxu0 %v1080
    %1360 = vmatpush.bf16.msra.mxu0 %v1079
    %1361 = vmatpush.bf16.msra.mxu0 %v1078
    %1362 = vmatpush.bf16.msra.mxu0 %v1077
    %1363 = vmatpush.bf16.msra.mxu0 %v1076
    %1364 = vmatpush.bf16.msra.mxu0 %v1075
    %1365 = vmatpush.bf16.msra.mxu0 %v1074
    %1366 = vmatpush.bf16.msra.mxu0 %v1073
    %1367 = vmatmul.bf16.gmra.mxu0 %v247
    %v1368 = vpop.f32.mrf.mxu0
    %v1369 = vadd.f32 %v1356, %v1368
    %v1370 = vpop.f32.mrf.mxu0
    %1371 = vdwg.mxu0
    %1372 = vmatpush.bf16.msra.mxu0 %v1088
    %1373 = vmatpush.bf16.msra.mxu0 %v1087
    %1374 = vmatpush.bf16.msra.mxu0 %v1086
    %1375 = vmatpush.bf16.msra.mxu0 %v1085
    %1376 = vmatpush.bf16.msra.mxu0 %v1084
    %1377 = vmatpush.bf16.msra.mxu0 %v1083
    %1378 = vmatpush.bf16.msra.mxu0 %v1082
    %1379 = vmatpush.bf16.msra.mxu0 %v1081
    %1380 = vmatmul.bf16.gmra.mxu0 %v248
    %v1381 = vpop.f32.mrf.mxu0
    %v1382 = vadd.f32 %v1369, %v1381
    %v1383 = vpop.f32.mrf.mxu0
    %1384 = vdwg.mxu0
    %1385 = vmatpush.bf16.msra.mxu0 %v1096
    %1386 = vmatpush.bf16.msra.mxu0 %v1095
    %1387 = vmatpush.bf16.msra.mxu0 %v1094
    %1388 = vmatpush.bf16.msra.mxu0 %v1093
    %1389 = vmatpush.bf16.msra.mxu0 %v1092
    %1390 = vmatpush.bf16.msra.mxu0 %v1091
    %1391 = vmatpush.bf16.msra.mxu0 %v1090
    %1392 = vmatpush.bf16.msra.mxu0 %v1089
    %1393 = vmatmul.bf16.gmra.mxu0 %v249
    %v1394 = vpop.f32.mrf.mxu0
    %v1395 = vadd.f32 %v1382, %v1394
    %v1396 = vpop.f32.mrf.mxu0
    %1397 = vdwg.mxu0
    %1398 = vmatpush.bf16.msra.mxu0 %v1104
    %1399 = vmatpush.bf16.msra.mxu0 %v1103
    %1400 = vmatpush.bf16.msra.mxu0 %v1102
    %1401 = vmatpush.bf16.msra.mxu0 %v1101
    %1402 = vmatpush.bf16.msra.mxu0 %v1100
    %1403 = vmatpush.bf16.msra.mxu0 %v1099
    %1404 = vmatpush.bf16.msra.mxu0 %v1098
    %1405 = vmatpush.bf16.msra.mxu0 %v1097
    %1406 = vmatmul.bf16.gmra.mxu0 %v250
    %v1407 = vpop.f32.mrf.mxu0
    %v1408 = vadd.f32 %v1395, %v1407
    %v1409 = vpop.f32.mrf.mxu0
    %1410 = vdwg.mxu0
    %1411 = vmatpush.bf16.msra.mxu0 %v1112
    %1412 = vmatpush.bf16.msra.mxu0 %v1111
    %1413 = vmatpush.bf16.msra.mxu0 %v1110
    %1414 = vmatpush.bf16.msra.mxu0 %v1109
    %1415 = vmatpush.bf16.msra.mxu0 %v1108
    %1416 = vmatpush.bf16.msra.mxu0 %v1107
    %1417 = vmatpush.bf16.msra.mxu0 %v1106
    %1418 = vmatpush.bf16.msra.mxu0 %v1105
    %1419 = vmatmul.bf16.gmra.mxu0 %v251
    %v1420 = vpop.f32.mrf.mxu0
    %v1421 = vadd.f32 %v1408, %v1420
    %v1422 = vpop.f32.mrf.mxu0
    %1423 = vdwg.mxu0
    %1424 = vmatpush.bf16.msra.mxu0 %v1120
    %1425 = vmatpush.bf16.msra.mxu0 %v1119
    %1426 = vmatpush.bf16.msra.mxu0 %v1118
    %1427 = vmatpush.bf16.msra.mxu0 %v1117
    %1428 = vmatpush.bf16.msra.mxu0 %v1116
    %1429 = vmatpush.bf16.msra.mxu0 %v1115
    %1430 = vmatpush.bf16.msra.mxu0 %v1114
    %1431 = vmatpush.bf16.msra.mxu0 %v1113
    %1432 = vmatmul.bf16.gmra.mxu0 %v252
    %v1433 = vpop.f32.mrf.mxu0
    %v1434 = vadd.f32 %v1421, %v1433
    %v1435 = vpop.f32.mrf.mxu0
    %1436 = vdwg.mxu0
    %1437 = vmatpush.bf16.msra.mxu0 %v1128
    %1438 = vmatpush.bf16.msra.mxu0 %v1127
    %1439 = vmatpush.bf16.msra.mxu0 %v1126
    %1440 = vmatpush.bf16.msra.mxu0 %v1125
    %1441 = vmatpush.bf16.msra.mxu0 %v1124
    %1442 = vmatpush.bf16.msra.mxu0 %v1123
    %1443 = vmatpush.bf16.msra.mxu0 %v1122
    %1444 = vmatpush.bf16.msra.mxu0 %v1121
    %1445 = vmatmul.bf16.gmra.mxu0 %v253
    %v1446 = vpop.f32.mrf.mxu0
    %v1447 = vadd.f32 %v1434, %v1446
    %v1448 = vpop.f32.mrf.mxu0
    %1449 = vdwg.mxu0
    %1450 = vmatpush.bf16.msra.mxu0 %v1136
    %1451 = vmatpush.bf16.msra.mxu0 %v1135
    %1452 = vmatpush.bf16.msra.mxu0 %v1134
    %1453 = vmatpush.bf16.msra.mxu0 %v1133
    %1454 = vmatpush.bf16.msra.mxu0 %v1132
    %1455 = vmatpush.bf16.msra.mxu0 %v1131
    %1456 = vmatpush.bf16.msra.mxu0 %v1130
    %1457 = vmatpush.bf16.msra.mxu0 %v1129
    %1458 = vmatmul.bf16.gmra.mxu0 %v254
    %v1459 = vpop.f32.mrf.mxu0
    %v1460 = vadd.f32 %v1447, %v1459
    %v1461 = vpop.f32.mrf.mxu0
    %1462 = vdwg.mxu0
    %1463 = vmatpush.bf16.msra.mxu0 %v1144
    %1464 = vmatpush.bf16.msra.mxu0 %v1143
    %1465 = vmatpush.bf16.msra.mxu0 %v1142
    %1466 = vmatpush.bf16.msra.mxu0 %v1141
    %1467 = vmatpush.bf16.msra.mxu0 %v1140
    %1468 = vmatpush.bf16.msra.mxu0 %v1139
    %1469 = vmatpush.bf16.msra.mxu0 %v1138
    %1470 = vmatpush.bf16.msra.mxu0 %v1137
    %1471 = vmatmul.bf16.gmra.mxu0 %v255
    %v1472 = vpop.f32.mrf.mxu0
    %v1473 = vadd.f32 %v1460, %v1472
    %v1474 = vpop.f32.mrf.mxu0
    %1475 = vdwg.mxu0
    %1476 = vmatpush.bf16.msra.mxu0 %v1152
    %1477 = vmatpush.bf16.msra.mxu0 %v1151
    %1478 = vmatpush.bf16.msra.mxu0 %v1150
    %1479 = vmatpush.bf16.msra.mxu0 %v1149
    %1480 = vmatpush.bf16.msra.mxu0 %v1148
    %1481 = vmatpush.bf16.msra.mxu0 %v1147
    %1482 = vmatpush.bf16.msra.mxu0 %v1146
    %1483 = vmatpush.bf16.msra.mxu0 %v1145
    %1484 = vmatmul.bf16.gmra.mxu0 %v256
    %v1485 = vpop.f32.mrf.mxu0
    %v1486 = vadd.f32 %v1473, %v1485
    %v1487 = vpop.f32.mrf.mxu0
    %1488 = vdwg.mxu0
    %v1489 = vrot.slane %v1486, 4
    %v1490 = vadd.f32 %v1486, %v1489
    %v1491 = vrot.slane %v1490, 2
    %v1492 = vadd.f32 %v1490, %v1491
    %v1493 = vrot.slane %v1492, 1
    %v1494 = vadd.f32 %v1492, %v1493
    %v1495 = vrcp.pop 8.0
    %v1496 = vmul.f32 8.0, %v1495
    %v1497 = vsub.f32 1.0, %v1496
    %v1498 = vmul.f32 %v1495, %v1497
    %v1499 = vadd.f32 %v1495, %v1498
    %vm1500 = vweird.f32 %v1495
    %v1501 = vsel %vm1500, %v1495, %v1499
    %v1502 = vmul.f32 %v1494, %v1501
    %v1503 = vsub.f32 %v1486, %v1502
    %v1504 = vmul.f32 %v1503, %v1503
    %v1505 = vrot.slane %v1504, 4
    %v1506 = vadd.f32 %v1504, %v1505
    %v1507 = vrot.slane %v1506, 2
    %v1508 = vadd.f32 %v1506, %v1507
    %v1509 = vrot.slane %v1508, 1
    %v1510 = vadd.f32 %v1508, %v1509
    %v1511 = vmul.f32 %v1510, %v1501
    %v1512 = vadd.f32 %v1511, 1e-05
    %v1513 = vrsqrt.pop %v1512
    %v1514 = vmul.f32 %v1513, %v1512
    %v1515 = vmul.f32 %v1514, %v1513
    %v1516 = vmul.f32 0.5, %v1515
    %v1517 = vsub.f32 1.5, %v1516
    %v1518 = vmul.f32 %v1513, %v1517
    %vm1519 = vweird.f32 %v1512
    %vm1520 = vweird.f32 %v1513
    %vm1521 = vmor %vm1519, %vm1520
    %v1522 = vsel %vm1521, %v1513, %v1518
    %v1523 = vmul.f32 %v1503, %v1522
    %v1524 = vld [vmem:[%s3] sm:$0x1]
    %v1525 = vld [vmem:[%s3 + $0x1] sm:$0x1]
    %v1526 = vperm.slane %v1524, 0
    %v1527 = vmul.f32 %v1523, %v1526
    %v1528 = vperm.slane %v1525, 0
    %v1529 = vadd.f32 %v1527, %v1528
    %1530 = vst [vmem:[#allocation5] sm:$0xff] %v1529
    // Predicated region
    $region22: #{encoder_forward.1} parent=1 // pred_check
      _
    $region23: #{encoder_forward.1} parent=1 // pred_check_branch
      %1532 = sbr.rel (0) target = $region25
    $region24: #{encoder_forward.1} parent=1 // pred_region
      %1534 = vsyncadd [#allocation4], 0
      %s1536 = sshll.u32 [#allocation5], 4
      %s1537 = int_to_ptr.vmem [resolvable:$true] %s1536
      %s1538 = sshll.u32 %s4, 4
      %s1539 = int_to_ptr.hbm [resolvable:$true] %s1538
      %1541 = dma.vmem_to_hbm [thread:$0]  %s1537, 128, %s1539, [#allocation4]
    $region25: #{encoder_forward.1} parent=1 // pred_fallthru
      _
    // Predicated region
    $region26: #{encoder_forward.1} parent=1 // pred_check
      _
    $region27: #{encoder_forward.1} parent=1 // pred_check_branch
      %1543 = sbr.rel (0) target = $region29
    $region28: #{encoder_forward.1} parent=1 // pred_region
      %1545 = dma.done [#allocation4], 128
    $region29: #{encoder_forward.1} parent=1 // pred_fallthru
      _
    %1546 = vsyncpa [#allocation3], 1
    %1547 = vsyncpa [#allocation4], 1

</llo_original>
